<compile_context>
chip_gen: v7x
topology: tpu7x:2x2x1
jax: 0.10.0
libtpu: 0.0.40
codegen_flags: <defaults>
</compile_context>

<pallas_src>
import jax
import jax.numpy as jnp
from jax.experimental import pallas as pl
from jax.experimental.pallas import tpu as pltpu


# ----------------------------------------------------------------------------
# parameter packing (call once per parameter set, pass the tuple around)
# ----------------------------------------------------------------------------
def pack_params(params, mxu_dtype=jnp.bfloat16):
    """Pack gate weights into one fused MXU operand.

    Returns (a_stack, uh, b_stack):
      a_stack = [[Wu, Uu], [Wr, Ur], [Wh, 0]]  (3n, 2n)  in mxu_dtype
      uh      = Uh                              (n, n)    in mxu_dtype
      b_stack = [bu; br; bh]                    (3n, m)   in f32
    """
    n = params["Wu"].shape[0]
    zeros = jnp.zeros((n, n), params["Wh"].dtype)
    row_u = jnp.concatenate([params["Wu"], params["Uu"]], axis=1)
    row_r = jnp.concatenate([params["Wr"], params["Ur"]], axis=1)
    row_h = jnp.concatenate([params["Wh"], zeros], axis=1)
    a_stack = jnp.concatenate([row_u, row_r, row_h], axis=0).astype(mxu_dtype)
    uh = params["Uh"].astype(mxu_dtype)
    b_stack = jnp.concatenate([params["bu"], params["br"], params["bh"]],
                              axis=0).astype(jnp.float32)
    return a_stack, uh, b_stack


def _ensure_packed(params, mxu_dtype=jnp.bfloat16):
    if isinstance(params, dict):
        return pack_params(params, mxu_dtype)
    return params


def _packed_bytes(packed):
    return sum(int(x.size) * x.dtype.itemsize for x in packed)


_DEFAULT_SCOPED_VMEM = 16 * 1024 * 1024  # v5e default scoped VMEM (most restrictive)


def _compiler_params(est_vmem_bytes, dimension_semantics=None):
    """Build CompilerParams; raise scoped VMEM only when the estimate needs it."""
    kwargs = {}
    if dimension_semantics is not None:
        kwargs["dimension_semantics"] = dimension_semantics
    if est_vmem_bytes > _DEFAULT_SCOPED_VMEM:
        # Cap well below v7x's 64 MiB physical VMEM; beyond this, switch to K-tiling.
        kwargs["vmem_limit_bytes"] = int(min(est_vmem_bytes * 1.25, 60 * 1024 * 1024))
    if not kwargs:
        return None
    return pltpu.CompilerParams(**kwargs)


# ----------------------------------------------------------------------------
# shared in-kernel gate math
# ----------------------------------------------------------------------------
def _matgru_step(z, q_f32, a_stack, uh, b_stack):
    """One MatGRU step.

    z: (n, m) any dtype (cast to MXU dtype), q_f32: (n, m) f32,
    a_stack: (3n, 2n), uh: (n, n) in MXU dtype, b_stack: (3n, m) f32.
    Returns new_Q in f32.
    """
    n = uh.shape[0]
    xz = jnp.concatenate([z.astype(a_stack.dtype), q_f32.astype(a_stack.dtype)], axis=0)
    # Single fused MXU call: [[Wu,Uu],[Wr,Ur],[Wh,0]] @ [z; q]  (K = 2n)
    wzuq = jnp.dot(a_stack, xz, preferred_element_type=jnp.float32) + b_stack  # (3n, m)

    update = jax.nn.sigmoid(wzuq[0:n])
    reset = jax.nn.sigmoid(wzuq[n:2 * n])

    h_in = (reset * q_f32).astype(uh.dtype)
    h_cap = jnp.tanh(wzuq[2 * n:3 * n]
                     + jnp.dot(uh, h_in, preferred_element_type=jnp.float32))

    # (1-u)*q + u*h == q + u*(h - q)
    return q_f32 + update * (h_cap - q_f32)


# ----------------------------------------------------------------------------
# single-step kernels
# ----------------------------------------------------------------------------
def _matgru_cell_kernel(z_ref, q_ref, a_ref, uh_ref, b_ref, out_ref):
    new_q = _matgru_step(z_ref[...], q_ref[...].astype(jnp.float32),
                         a_ref[...], uh_ref[...], b_ref[...])
    out_ref[...] = new_q.astype(out_ref.dtype)


def _matgru_cell_self_kernel(q_ref, a_ref, uh_ref, b_ref, out_ref):
    # z_topk is None -> z == prev_Q; reuse the single ref (no duplicate DMA).
    q = q_ref[...].astype(jnp.float32)
    new_q = _matgru_step(q, q, a_ref[...], uh_ref[...], b_ref[...])
    out_ref[...] = new_q.astype(out_ref.dtype)


def mat_gru_cell(prev_Q, params, z_topk=None, mxu_dtype=jnp.bfloat16):
    """Single MatGRUCell forward. prev_Q, z_topk: (in_feats, out_feats).

    `params` may be the raw dict or a pre-packed tuple from pack_params (preferred
    when calling repeatedly)."""
    a_stack, uh, b_stack = _ensure_packed(params, mxu_dtype)
    n, m = prev_Q.shape
    q = prev_Q.astype(jnp.float32)

    full = lambda shape: pl.BlockSpec(shape, lambda: (0,) * len(shape))
    est = 2 * (_packed_bytes((a_stack, uh, b_stack)) + 3 * n * m * 4)
    cp = _compiler_params(est)
    out_shape = jax.ShapeDtypeStruct((n, m), prev_Q.dtype)

    if z_topk is None:
        return pl.pallas_call(
            _matgru_cell_self_kernel,
            out_shape=out_shape,
            grid=(),
            in_specs=[full((n, m)),            # prev_Q (also used as z)
                      full((3 * n, 2 * n)),    # A = [[Wu,Uu],[Wr,Ur],[Wh,0]]
                      full((n, n)),            # Uh
                      full((3 * n, m))],       # biases
            out_specs=full((n, m)),
            compiler_params=cp,
        )(q, a_stack, uh, b_stack)

    z = z_topk.astype(mxu_dtype)  # z only feeds the MXU; stream in bf16 (same numerics)
    return pl.pallas_call(
        _matgru_cell_kernel,
        out_shape=out_shape,
        grid=(),
        in_specs=[full((n, m)),                # z (bf16)
                  full((n, m)),                # prev_Q (f32)
                  full((3 * n, 2 * n)),        # A
                  full((n, n)),                # Uh
                  full((3 * n, m))],           # biases
        out_specs=full((n, m)),
        compiler_params=cp,
    )(z, q, a_stack, uh, b_stack)


# ----------------------------------------------------------------------------
# T-step recurrence, variant A: everything resident, ONE grid=() call
# ----------------------------------------------------------------------------
def _matgru_seq_fused_kernel(zseq_ref, q0_ref, a_ref, uh_ref, b_ref, out_ref):
    a = a_ref[...]
    uh = uh_ref[...]
    b = b_ref[...]
    T = zseq_ref.shape[0]

    def body(t, q):
        new_q = _matgru_step(zseq_ref[t], q, a, uh, b)
        out_ref[t] = new_q.astype(out_ref.dtype)
        return new_q

    unroll = True if T <= 16 else 8
    jax.lax.fori_loop(0, T, body, q0_ref[...].astype(jnp.float32), unroll=unroll)


def _mat_gru_cell_seq_fused(prev_Q, packed, z_seq):
    a_stack, uh, b_stack = packed
    T, n, m = z_seq.shape
    z = z_seq.astype(a_stack.dtype)          # bf16 stream of the only big input
    q0 = prev_Q.astype(jnp.float32)

    full = lambda shape: pl.BlockSpec(shape, lambda: (0,) * len(shape))
    est = 2 * (z.size * z.dtype.itemsize + T * n * m * 4 + n * m * 4
               + _packed_bytes(packed))

    return pl.pallas_call(
        _matgru_seq_fused_kernel,
        out_shape=jax.ShapeDtypeStruct((T, n, m), prev_Q.dtype),
        grid=(),                               # no per-step grid overhead
        in_specs=[full((T, n, m)),             # z_seq, fully VMEM-resident (bf16)
                  full((n, m)),                # initial Q (f32)
                  full((3 * n, 2 * n)),        # A
                  full((n, n)),                # Uh
                  full((3 * n, m))],           # biases
        out_specs=full((T, n, m)),
        compiler_params=_compiler_params(est),
    )(z, q0, a_stack, uh, b_stack)


# ----------------------------------------------------------------------------
# T-step recurrence, variant B: grid=(T,) streaming (large T / large n)
# ----------------------------------------------------------------------------
def _matgru_seq_stream_kernel(z_ref, q0_ref, a_ref, uh_ref, b_ref, out_ref, q_scr):
    @pl.when(pl.program_id(0) == 0)
    def _init():
        q_scr[...] = q0_ref[...].astype(jnp.float32)

    new_q = _matgru_step(z_ref[0], q_scr[...], a_ref[...], uh_ref[...], b_ref[...])
    q_scr[...] = new_q                         # carry Q across grid steps
    out_ref[0] = new_q.astype(out_ref.dtype)


def _mat_gru_cell_seq_streamed(prev_Q, params, z_seq, mxu_dtype=jnp.bfloat16):
    a_stack, uh, b_stack = _ensure_packed(params, mxu_dtype)
    T, n, m = z_seq.shape
    z = z_seq.astype(a_stack.dtype)            # bf16: halves per-step DMA bytes
    q0 = prev_Q.astype(jnp.float32)

    est = 2 * (2 * n * m * 2 + 2 * n * m * 4 + n * m * 8 + _packed_bytes((a_stack, uh, b_stack)))
    # For large n, consider pipeline_mode=pl.Buffered(3) on the z BlockSpec to hide DMA.
    return pl.pallas_call(
        _matgru_seq_stream_kernel,
        out_shape=jax.ShapeDtypeStruct((T, n, m), prev_Q.dtype),
        grid=(T,),
        in_specs=[
            pl.BlockSpec((1, n, m), lambda t: (t, 0, 0)),      # z_t (streamed, bf16)
            pl.BlockSpec((n, m), lambda t: (0, 0)),            # initial Q (resident)
            pl.BlockSpec((3 * n, 2 * n), lambda t: (0, 0)),    # A       (resident)
            pl.BlockSpec((n, n), lambda t: (0, 0)),            # Uh      (resident)
            pl.BlockSpec((3 * n, m), lambda t: (0, 0)),        # biases  (resident)
        ],
        out_specs=pl.BlockSpec((1, n, m), lambda t: (t, 0, 0)),
        scratch_shapes=[pltpu.VMEM((n, m), jnp.float32)],      # carried hidden state Q
        compiler_params=_compiler_params(est, dimension_semantics=("arbitrary",)),
    )(z, q0, a_stack, uh, b_stack)


_FUSED_SEQ_VMEM_BUDGET = 8 * 1024 * 1024   # keep the all-resident path comfortably small


def mat_gru_cell_seq(prev_Q, params, z_seq, mxu_dtype=jnp.bfloat16):
    """Apply the MatGRU cell over z_seq[t], t=0..T-1. Returns Q after every step
    (T, in_feats, out_feats). Small problems use one fused grid=() call; large
    ones stream z per step with VMEM-resident weights."""
    packed = _ensure_packed(params, mxu_dtype)
    T, n, m = z_seq.shape
    resident_bytes = (T * n * m * 2          # z_seq (bf16)
                      + T * n * m * 4        # output (f32)
                      + n * m * 8            # q0 + carried q
                      + _packed_bytes(packed))
    if resident_bytes <= _FUSED_SEQ_VMEM_BUDGET:
        return _mat_gru_cell_seq_fused(prev_Q, packed, z_seq)
    return _mat_gru_cell_seq_streamed(prev_Q, packed, z_seq, mxu_dtype)


# ----------------------------------------------------------------------------
# reference + init
# ----------------------------------------------------------------------------
def init_params(key, in_feats, out_feats, dtype=jnp.float32):
    keys = jax.random.split(key, 9)
    scale_w = (2.0 / (in_feats + in_feats)) ** 0.5
    mk_w = lambda k: (scale_w * jax.random.normal(k, (in_feats, in_feats))).astype(dtype)
    mk_b = lambda k: (0.1 * jax.random.normal(k, (in_feats, out_feats))).astype(dtype)
    return {
        "Wu": mk_w(keys[0]), "Uu": mk_w(keys[1]), "bu": mk_b(keys[2]),
        "Wr": mk_w(keys[3]), "Ur": mk_w(keys[4]), "br": mk_b(keys[5]),
        "Wh": mk_w(keys[6]), "Uh": mk_w(keys[7]), "bh": mk_b(keys[8]),
    }


def mat_gru_cell_ref(prev_Q, params, z_topk=None, mxu_dtype=None):
    """Pure-JAX reference. If mxu_dtype is given, matmul inputs are cast to it
    (mirrors the kernel's bf16 MXU path) with f32 accumulation."""
    if z_topk is None:
        z_topk = prev_Q
    cast = (lambda x: x.astype(mxu_dtype)) if mxu_dtype is not None else (lambda x: x)
    dot = lambda a, b: jnp.dot(cast(a), cast(b), preferred_element_type=jnp.float32)
    update = jax.nn.sigmoid(dot(params["Wu"], z_topk) + dot(params["Uu"], prev_Q) + params["bu"])
    reset = jax.nn.sigmoid(dot(params["Wr"], z_topk) + dot(params["Ur"], prev_Q) + params["br"])
    h_cap = jnp.tanh(dot(params["Wh"], z_topk) + dot(params["Uh"], reset * prev_Q) + params["bh"])
    return (1.0 - update) * prev_Q + update * h_cap


# ----------------------------------------------------------------------------
if __name__ == "__main__":
    in_feats, out_feats = 32, 16      # prev_Q is the (in_feats, out_feats) GCN weight matrix
    T = 4                             # timesteps for the recurrence variants

    key = jax.random.PRNGKey(0)
    k_params, k_q, k_z, k_zs = jax.random.split(key, 4)

    params = init_params(k_params, in_feats, out_feats)
    packed = pack_params(params)      # pack ONCE per parameter set (hoisted out of wrappers)
    prev_Q = jax.random.normal(k_q, (in_feats, out_feats), jnp.float32)
    z_topk = jax.random.normal(k_z, (in_feats, out_feats), jnp.float32)

    # --- single-step kernel ---
    new_Q = mat_gru_cell(prev_Q, packed, z_topk)
    jax.block_until_ready(new_Q)
    assert new_Q.shape == (in_feats, out_feats)

    ref_bf16 = mat_gru_cell_ref(prev_Q, params, z_topk, mxu_dtype=jnp.bfloat16)
    assert jnp.allclose(new_Q, ref_bf16, atol=1e-2, rtol=1e-2), "mismatch vs matched-precision ref"
    ref_f32 = mat_gru_cell_ref(prev_Q, params, z_topk)
    assert jnp.allclose(new_Q, ref_f32, atol=5e-2, rtol=5e-2), "mismatch vs f32 ref"

    # --- z_topk=None path (z defaults to prev_Q, single input DMA) ---
    new_Q2 = mat_gru_cell(prev_Q, packed, None)
    jax.block_until_ready(new_Q2)
    assert jnp.allclose(new_Q2, mat_gru_cell_ref(prev_Q, params, None, mxu_dtype=jnp.bfloat16),
                        atol=1e-2, rtol=1e-2), "mismatch (z_topk=None)"

    # --- T-step recurrence: fused grid=() path (selected automatically at these shapes) ---
    z_seq = jax.random.normal(k_zs, (T, in_feats, out_feats), jnp.float32)
    q_seq = mat_gru_cell_seq(prev_Q, packed, z_seq)
    jax.block_until_ready(q_seq)
    assert q_seq.shape == (T, in_feats, out_feats)

    q_ref = prev_Q
    refs = []
    for t in range(T):
        q_ref = mat_gru_cell_ref(q_ref, params, z_seq[t], mxu_dtype=jnp.bfloat16)
        refs.append(q_ref)
    ref_seq = jnp.stack(refs)
    assert jnp.allclose(q_seq, ref_seq, atol=2e-2, rtol=2e-2), "mismatch in fused sequence"

    # --- streaming grid=(T,) variant (large-T path) — exercise it too ---
    q_seq_stream = _mat_gru_cell_seq_streamed(prev_Q, packed, z_seq)
    jax.block_until_ready(q_seq_stream)
    assert jnp.allclose(q_seq_stream, ref_seq, atol=2e-2, rtol=2e-2), "mismatch in streamed sequence"

    print("KERNEL_OK")
</pallas_src>

<mosaic_0001>
module attributes {stable_mosaic.version = 11 : i64} {
  func.func @_matgru_cell_kernel(%arg0: memref<32x16xbf16, #tpu.memory_space<vmem>>, %arg1: memref<32x16xf32, #tpu.memory_space<vmem>>, %arg2: memref<96x64xbf16, #tpu.memory_space<vmem>>, %arg3: memref<32x32xbf16, #tpu.memory_space<vmem>>, %arg4: memref<96x16xf32, #tpu.memory_space<vmem>>, %arg5: memref<32x16xf32, #tpu.memory_space<vmem>>) attributes {dimension_semantics = [], scalar_prefetch = 0 : i64, scratch_operands = 0 : i64, tpu.core_type = #tpu.core_type<tc>} {
    %c0 = arith.constant 0 : index
    %c0_0 = arith.constant 0 : index
    %0 = vector.load %arg0[%c0, %c0_0] : memref<32x16xbf16, #tpu.memory_space<vmem>>, vector<32x16xbf16>
    %c0_1 = arith.constant 0 : index
    %c0_2 = arith.constant 0 : index
    %1 = vector.load %arg1[%c0_1, %c0_2] : memref<32x16xf32, #tpu.memory_space<vmem>>, vector<32x16xf32>
    %c0_3 = arith.constant 0 : index
    %c0_4 = arith.constant 0 : index
    %2 = vector.load %arg2[%c0_3, %c0_4] : memref<96x64xbf16, #tpu.memory_space<vmem>>, vector<96x64xbf16>
    %c0_5 = arith.constant 0 : index
    %c0_6 = arith.constant 0 : index
    %3 = vector.load %arg3[%c0_5, %c0_6] : memref<32x32xbf16, #tpu.memory_space<vmem>>, vector<32x32xbf16>
    %c0_7 = arith.constant 0 : index
    %c0_8 = arith.constant 0 : index
    %4 = vector.load %arg4[%c0_7, %c0_8] : memref<96x16xf32, #tpu.memory_space<vmem>>, vector<96x16xf32>
    %5 = arith.truncf %1 : vector<32x16xf32> to vector<32x16xbf16>
    %6 = tpu.concatenate %0, %5 in 0 : vector<32x16xbf16>, vector<32x16xbf16> -> vector<64x16xbf16>
    %cst = arith.constant dense<0.000000e+00> : vector<96x16xf32>
    %7 = tpu.matmul %2, %6, %cst {dimension_numbers = #tpu.dot_dimension_numbers<[1], [0], [0], [1], [0, 0, 1, 1], [], []>} : vector<96x64xbf16>, vector<64x16xbf16>, vector<96x16xf32> -> vector<96x16xf32>
    %8 = arith.addf %7, %4 : vector<96x16xf32>
    %9 = vector.extract_strided_slice %8 {offsets = [0, 0], sizes = [32, 16], strides = [1, 1]} : vector<96x16xf32> to vector<32x16xf32>
    %10 = arith.negf %9 : vector<32x16xf32>
    %11 = math.exp %10 : vector<32x16xf32>
    %cst_9 = arith.constant 1.000000e+00 : f32
    %12 = vector.broadcast %cst_9 : f32 to vector<32x16xf32>
    %13 = arith.addf %12, %11 : vector<32x16xf32>
    %14 = arith.divf %12, %13 : vector<32x16xf32>
    %15 = vector.extract_strided_slice %8 {offsets = [32, 0], sizes = [32, 16], strides = [1, 1]} : vector<96x16xf32> to vector<32x16xf32>
    %16 = arith.negf %15 : vector<32x16xf32>
    %17 = math.exp %16 : vector<32x16xf32>
    %cst_10 = arith.constant 1.000000e+00 : f32
    %18 = vector.broadcast %cst_10 : f32 to vector<32x16xf32>
    %19 = arith.addf %18, %17 : vector<32x16xf32>
    %20 = arith.divf %18, %19 : vector<32x16xf32>
    %21 = arith.mulf %20, %1 : vector<32x16xf32>
    %22 = arith.truncf %21 : vector<32x16xf32> to vector<32x16xbf16>
    %23 = vector.extract_strided_slice %8 {offsets = [64, 0], sizes = [32, 16], strides = [1, 1]} : vector<96x16xf32> to vector<32x16xf32>
    %cst_11 = arith.constant dense<0.000000e+00> : vector<32x16xf32>
    %24 = tpu.matmul %3, %22, %cst_11 {dimension_numbers = #tpu.dot_dimension_numbers<[1], [0], [0], [1], [0, 0, 1, 1], [], []>} : vector<32x32xbf16>, vector<32x16xbf16>, vector<32x16xf32> -> vector<32x16xf32>
    %25 = arith.addf %23, %24 : vector<32x16xf32>
    %26 = math.tanh %25 : vector<32x16xf32>
    %27 = arith.subf %26, %1 : vector<32x16xf32>
    %28 = arith.mulf %14, %27 : vector<32x16xf32>
    %29 = arith.addf %1, %28 : vector<32x16xf32>
    %c0_12 = arith.constant 0 : index
    %c0_13 = arith.constant 0 : index
    %30 = vector.load %arg5[%c0_12, %c0_13] : memref<32x16xf32, #tpu.memory_space<vmem>>, vector<32x16xf32>
    tpu.vector_store %arg5[%c0_12, %c0_13], %29 {strides = array<i32>} : memref<32x16xf32, #tpu.memory_space<vmem>>, vector<32x16xf32>,
    return
  }
}

</mosaic_0001>

<llo_original>
// kernel: tpu_custom_call.1
$region0: #{tpu_custom_call.1}
  #allocation0 [shape = 'u32[]', space=smem, size = 0x4, offset = 0x4, fixed_abs, tag = 'smem constant byte address 0x4 - core index']
  #allocation1 [shape = 'u32[144,128]{1,0:T(1,128)}', space=vmem, size = 0x12000, scoped, tag = 'internal scratch']
  %s0 = inlined_call_operand.vmem [shape: bf16[32,16], index: 0, kind: input, shape index: {}]
  %s1 = inlined_call_operand.vmem [shape: f32[32,16], index: 1, kind: input, shape index: {}]
  %s2 = inlined_call_operand.vmem [shape: bf16[96,64], index: 2, kind: input, shape index: {}]
  %s3 = inlined_call_operand.vmem [shape: bf16[32,32], index: 3, kind: input, shape index: {}]
  %s4 = inlined_call_operand.vmem [shape: f32[96,16], index: 4, kind: input, shape index: {}]
  %s5 = inlined_call_operand.vmem [shape: f32[32,16], index: 5, kind: output, shape index: {}]
  %s6 = sld [smem:[#allocation0]]
  $region30: #{tpu_custom_call.1} parent=0
    _
  %s8 = ssub.s32 1, %s6
  %s9 = scalar_select 0, %s8, %s6
  // Predicated region
  $region2: #{tpu_custom_call.1} parent=0 // pred_check
    _
  $region3: #{tpu_custom_call.1} parent=0 // pred_check_branch
    %11 = sbr.rel (0) target = $region5
  $region4: #{tpu_custom_call.1} parent=0 // pred_region
    _
  $region5: #{tpu_custom_call.1} parent=0 // pred_fallthru
    _
  // Predicated region
  $region6: #{tpu_custom_call.1} parent=0 // pred_check
    _
  $region7: #{tpu_custom_call.1} parent=0 // pred_check_branch
    %13 = sbr.rel (0) target = $region9
  $region8: #{tpu_custom_call.1} parent=0 // pred_region
    _
  $region9: #{tpu_custom_call.1} parent=0 // pred_fallthru
    _
  // Predicated region
  $region10: #{tpu_custom_call.1} parent=0 // pred_check
    _
  $region11: #{tpu_custom_call.1} parent=0 // pred_check_branch
    %15 = sbr.rel (0) target = $region13
  $region12: #{tpu_custom_call.1} parent=0 // pred_region
    _
  $region13: #{tpu_custom_call.1} parent=0 // pred_fallthru
    _
  // Predicated region
  $region14: #{tpu_custom_call.1} parent=0 // pred_check
    _
  $region15: #{tpu_custom_call.1} parent=0 // pred_check_branch
    %17 = sbr.rel (0) target = $region17
  $region16: #{tpu_custom_call.1} parent=0 // pred_region
    _
  $region17: #{tpu_custom_call.1} parent=0 // pred_fallthru
    _
  // Predicated region
  $region18: #{tpu_custom_call.1} parent=0 // pred_check
    _
  $region19: #{tpu_custom_call.1} parent=0 // pred_check_branch
    %19 = sbr.rel (0) target = $region21
  $region20: #{tpu_custom_call.1} parent=0 // pred_region
    _
  $region21: #{tpu_custom_call.1} parent=0 // pred_fallthru
    _
  %v21 = vld [vmem:[%s0] sm:$0xf]
  %v22 = vld [vmem:[%s0 + $0x4] sm:$0xf]
  %v23 = vld [vmem:[%s0 + $0x8] sm:$0xf]
  %v24 = vld [vmem:[%s0 + $0xc] sm:$0xf]
  %v25 = vld [vmem:[%s1] sm:$0xff]
  %v26 = vld [vmem:[%s1 + $0x8] sm:$0xff]
  %v27 = vld [vmem:[%s1 + $0x10] sm:$0xff]
  %v28 = vld [vmem:[%s1 + $0x18] sm:$0xff]
  %v29 = vld [vmem:[%s2] sm:$0xf]
  %v30 = vld [vmem:[%s2 + $0x4] sm:$0xf]
  %v31 = vld [vmem:[%s2 + $0x8] sm:$0xf]
  %v32 = vld [vmem:[%s2 + $0xc] sm:$0xf]
  %v33 = vld [vmem:[%s2 + $0x10] sm:$0xf]
  %v34 = vld [vmem:[%s2 + $0x14] sm:$0xf]
  %v35 = vld [vmem:[%s2 + $0x18] sm:$0xf]
  %v36 = vld [vmem:[%s2 + $0x1c] sm:$0xf]
  %v37 = vld [vmem:[%s2 + $0x20] sm:$0xf]
  %v38 = vld [vmem:[%s2 + $0x24] sm:$0xf]
  %v39 = vld [vmem:[%s2 + $0x28] sm:$0xf]
  %v40 = vld [vmem:[%s2 + $0x2c] sm:$0xf]
  %v41 = vld [vmem:[%s3] sm:$0xf]
  %v42 = vld [vmem:[%s3 + $0x4] sm:$0xf]
  %v43 = vld [vmem:[%s3 + $0x8] sm:$0xf]
  %v44 = vld [vmem:[%s3 + $0xc] sm:$0xf]
  %v45 = vld [vmem:[%s4] sm:$0xff]
  %v46 = vld [vmem:[%s4 + $0x8] sm:$0xff]
  %v47 = vld [vmem:[%s4 + $0x10] sm:$0xff]
  %v48 = vld [vmem:[%s4 + $0x18] sm:$0xff]
  %v49 = vld [vmem:[%s4 + $0x20] sm:$0xff]
  %v50 = vld [vmem:[%s4 + $0x28] sm:$0xff]
  %v51 = vld [vmem:[%s4 + $0x30] sm:$0xff]
  %v52 = vld [vmem:[%s4 + $0x38] sm:$0xff]
  %v53 = vld [vmem:[%s4 + $0x40] sm:$0xff]
  %v54 = vld [vmem:[%s4 + $0x48] sm:$0xff]
  %v55 = vld [vmem:[%s4 + $0x50] sm:$0xff]
  %v56 = vld [vmem:[%s4 + $0x58] sm:$0xff]
  %v57 = vpack.c.bf16 %v26, %v25
  %v58 = vpack.c.bf16 %v28, %v27
  %v63 = vunpack.c.l.b16 %v21
  %v64 = vunpack.c.l.b16 %v22
  %v65 = vunpack.c.l.b16 %v23
  %v66 = vunpack.c.l.b16 %v24
  %v67 = vpack.c.b16 %v64, %v63
  %v68 = vpack.c.b16 %v66, %v65
  %v83 = vunpack.c.l.b16 %v29
  %v84 = vunpack.c.l.b16 %v30
  %v85 = vunpack.c.l.b16 %v31
  %v86 = vunpack.c.l.b16 %v32
  %v87 = vunpack.c.l.b16 %v33
  %v88 = vunpack.c.l.b16 %v34
  %v89 = vunpack.c.l.b16 %v35
  %v90 = vunpack.c.l.b16 %v36
  %v91 = vunpack.c.l.b16 %v37
  %v92 = vunpack.c.l.b16 %v38
  %v93 = vunpack.c.l.b16 %v39
  %v94 = vunpack.c.l.b16 %v40
  %v95 = vpack.c.b16 %v84, %v83
  %v96 = vpack.c.b16 %v86, %v85
  %v97 = vpack.c.b16 %v88, %v87
  %v98 = vpack.c.b16 %v90, %v89
  %v99 = vpack.c.b16 %v92, %v91
  %v100 = vpack.c.b16 %v94, %v93
  %vm101 = vcmask 523264
  %v103 = vsel %vm101, %v95, 0
  %v106 = vsel %vm101, %v96, 0
  %v109 = vsel %vm101, %v97, 0
  %v112 = vsel %vm101, %v98, 0
  %v115 = vsel %vm101, %v99, 0
  %v118 = vsel %vm101, %v100, 0
  %120 = vmatprep.subr.bf16.mxu0 0
  %121 = vmatpush1.bf16.msra.mxu0 %v67
  %122 = vmatprep.subr.bf16.mxu0 0
  %123 = vmatpush1.bf16.msra.mxu0 %v68
  %124 = vmatprep.subr.bf16.mxu0 0
  %125 = vmatpush1.bf16.msra.mxu0 %v57
  %126 = vmatprep.subr.bf16.mxu0 0
  %127 = vmatpush1.bf16.msra.mxu0 %v58
  %128 = vmatprep.subr.bf16.mxu0 0
  %129 = vmatpush1.bf16.msra.mxu0 0
  %130 = vmatprep.subr.bf16.mxu0 0
  %131 = vmatpush1.bf16.msra.mxu0 0
  %132 = vmatprep.subr.bf16.mxu0 0
  %133 = vmatpush1.bf16.msra.mxu0 0
  %134 = vmatprep.subr.bf16.mxu0 0
  %135 = vmatpush1.bf16.msra.mxu0 0
  %136 = vmatprep.subr.bf16.mxu0 0
  %137 = vmatpush1.bf16.msra.mxu0 0
  %138 = vmatprep.subr.bf16.mxu0 0
  %139 = vmatpush1.bf16.msra.mxu0 0
  %140 = vmatprep.subr.bf16.mxu0 0
  %141 = vmatpush1.bf16.msra.mxu0 0
  %142 = vmatprep.subr.bf16.mxu0 0
  %143 = vmatpush1.bf16.msra.mxu0 0
  %144 = vmatprep.subr.bf16.mxu0 0
  %145 = vmatpush1.bf16.msra.mxu0 0
  %146 = vmatprep.subr.bf16.mxu0 0
  %147 = vmatpush1.bf16.msra.mxu0 0
  %148 = vmatprep.subr.bf16.mxu0 0
  %149 = vmatpush1.bf16.msra.mxu0 0
  %150 = vmatprep.subr.bf16.mxu0 0
  %151 = vmatpush1.bf16.msra.mxu0 0
  %152 = vmatprep.mubr.bf16.mxu0 0
  %153 = vmatmul.mubr.bf16.gmra.mrb[0].mxu0 %v103
  %v154 = vpop.f32.mrb[0].mxu0
  %v155 = vadd.f32 %v45, %v154
  %v156 = vpop.f32.mrb[0].mxu0
  %v157 = vpop.f32.mrb[0].mxu0
  %v158 = vadd.f32 %v46, %v157
  %v159 = vpop.f32.mrb[0].mxu0
  %160 = vmatprep.mubr.bf16.mxu0 0
  %161 = vmatmul.mubr.bf16.gmra.mrb[0].mxu0 %v106
  %v162 = vpop.f32.mrb[0].mxu0
  %v163 = vadd.f32 %v47, %v162
  %v164 = vpop.f32.mrb[0].mxu0
  %v165 = vpop.f32.mrb[0].mxu0
  %v166 = vadd.f32 %v48, %v165
  %v167 = vpop.f32.mrb[0].mxu0
  %168 = vmatprep.mubr.bf16.mxu0 0
  %169 = vmatmul.mubr.bf16.gmra.mrb[0].mxu0 %v109
  %v170 = vpop.f32.mrb[0].mxu0
  %v171 = vadd.f32 %v49, %v170
  %v172 = vpop.f32.mrb[0].mxu0
  %v173 = vpop.f32.mrb[0].mxu0
  %v174 = vadd.f32 %v50, %v173
  %v175 = vpop.f32.mrb[0].mxu0
  %176 = vmatprep.mubr.bf16.mxu0 0
  %177 = vmatmul.mubr.bf16.gmra.mrb[0].mxu0 %v112
  %v178 = vpop.f32.mrb[0].mxu0
  %v179 = vadd.f32 %v51, %v178
  %v180 = vpop.f32.mrb[0].mxu0
  %v181 = vpop.f32.mrb[0].mxu0
  %v182 = vadd.f32 %v52, %v181
  %v183 = vpop.f32.mrb[0].mxu0
  %184 = vmatprep.mubr.bf16.mxu0 0
  %185 = vmatmul.mubr.bf16.gmra.mrb[0].mxu0 %v115
  %v186 = vpop.f32.mrb[0].mxu0
  %v187 = vadd.f32 %v53, %v186
  %v188 = vpop.f32.mrb[0].mxu0
  %v189 = vpop.f32.mrb[0].mxu0
  %v190 = vadd.f32 %v54, %v189
  %v191 = vpop.f32.mrb[0].mxu0
  %192 = vmatprep.mubr.bf16.mxu0 0
  %193 = vmatmul.mubr.bf16.gmra.mrb[0].mxu0 %v118
  %v194 = vpop.f32.mrb[0].mxu0
  %v195 = vadd.f32 %v55, %v194
  %v196 = vpop.f32.mrb[0].mxu0
  %v197 = vpop.f32.mrb[0].mxu0
  %v198 = vadd.f32 %v56, %v197
  %v199 = vpop.f32.mrb[0].mxu0
  %200 = vdwg.mxu0
  %v201 = vxor.u32 %v155, 2147483648
  %v202 = vxor.u32 %v158, 2147483648
  %v203 = vxor.u32 %v163, 2147483648
  %v204 = vxor.u32 %v166, 2147483648
  %v205 = vmul.f32 %v201, 1.442695
  %v206 = vpow.pop %v205
  %v207 = vmul.f32 %v202, 1.442695
  %v208 = vpow.pop %v207
  %v209 = vmul.f32 %v203, 1.442695
  %v210 = vpow.pop %v209
  %v211 = vmul.f32 %v204, 1.442695
  %v212 = vpow.pop %v211
  %v213 = vadd.f32 %v206, 1.0
  %v214 = vadd.f32 %v208, 1.0
  %v215 = vadd.f32 %v210, 1.0
  %v216 = vadd.f32 %v212, 1.0
  %v217 = vrcp.pop %v213
  %v218 = vmul.f32 1.0, %v217
  %v219 = vrcp.pop %v214
  %v220 = vmul.f32 1.0, %v219
  %v221 = vrcp.pop %v215
  %v222 = vmul.f32 1.0, %v221
  %v223 = vrcp.pop %v216
  %v224 = vmul.f32 1.0, %v223
  %v225 = vxor.u32 %v171, 2147483648
  %v226 = vxor.u32 %v174, 2147483648
  %v227 = vxor.u32 %v179, 2147483648
  %v228 = vxor.u32 %v182, 2147483648
  %v229 = vmul.f32 %v225, 1.442695
  %v230 = vpow.pop %v229
  %v231 = vmul.f32 %v226, 1.442695
  %v232 = vpow.pop %v231
  %v233 = vmul.f32 %v227, 1.442695
  %v234 = vpow.pop %v233
  %v235 = vmul.f32 %v228, 1.442695
  %v236 = vpow.pop %v235
  %v237 = vadd.f32 %v230, 1.0
  %v238 = vadd.f32 %v232, 1.0
  %v239 = vadd.f32 %v234, 1.0
  %v240 = vadd.f32 %v236, 1.0
  %v241 = vrcp.pop %v237
  %v242 = vmul.f32 1.0, %v241
  %v243 = vrcp.pop %v238
  %v244 = vmul.f32 1.0, %v243
  %v245 = vrcp.pop %v239
  %v246 = vmul.f32 1.0, %v245
  %v247 = vrcp.pop %v240
  %v248 = vmul.f32 1.0, %v247
  %v249 = vmul.f32 %v242, %v25
  %v250 = vmul.f32 %v244, %v26
  %v251 = vmul.f32 %v246, %v27
  %v252 = vmul.f32 %v248, %v28
  %v253 = vpack.c.bf16 %v250, %v249
  %v254 = vpack.c.bf16 %v252, %v251
  %v259 = vunpack.c.l.b16 %v41
  %v260 = vunpack.c.l.b16 %v42
  %v261 = vunpack.c.l.b16 %v43
  %v262 = vunpack.c.l.b16 %v44
  %v263 = vpack.c.b16 %v260, %v259
  %v264 = vpack.c.b16 %v262, %v261
  %vm265 = vcmask 261120
  %v267 = vsel %vm265, %v263, 0
  %v270 = vsel %vm265, %v264, 0
  %272 = vmatprep.subr.bf16.mxu0 0
  %273 = vmatpush1.bf16.msra.mxu0 %v253
  %274 = vmatprep.subr.bf16.mxu0 0
  %275 = vmatpush1.bf16.msra.mxu0 %v254
  %276 = vmatprep.subr.bf16.mxu0 0
  %277 = vmatpush1.bf16.msra.mxu0 0
  %278 = vmatprep.subr.bf16.mxu0 0
  %279 = vmatpush1.bf16.msra.mxu0 0
  %280 = vmatprep.subr.bf16.mxu0 0
  %281 = vmatpush1.bf16.msra.mxu0 0
  %282 = vmatprep.subr.bf16.mxu0 0
  %283 = vmatpush1.bf16.msra.mxu0 0
  %284 = vmatprep.subr.bf16.mxu0 0
  %285 = vmatpush1.bf16.msra.mxu0 0
  %286 = vmatprep.subr.bf16.mxu0 0
  %287 = vmatpush1.bf16.msra.mxu0 0
  %288 = vmatprep.subr.bf16.mxu0 0
  %289 = vmatpush1.bf16.msra.mxu0 0
  %290 = vmatprep.subr.bf16.mxu0 0
  %291 = vmatpush1.bf16.msra.mxu0 0
  %292 = vmatprep.subr.bf16.mxu0 0
  %293 = vmatpush1.bf16.msra.mxu0 0
  %294 = vmatprep.subr.bf16.mxu0 0
  %295 = vmatpush1.bf16.msra.mxu0 0
  %296 = vmatprep.subr.bf16.mxu0 0
  %297 = vmatpush1.bf16.msra.mxu0 0
  %298 = vmatprep.subr.bf16.mxu0 0
  %299 = vmatpush1.bf16.msra.mxu0 0
  %300 = vmatprep.subr.bf16.mxu0 0
  %301 = vmatpush1.bf16.msra.mxu0 0
  %302 = vmatprep.subr.bf16.mxu0 0
  %303 = vmatpush1.bf16.msra.mxu0 0
  %304 = vmatprep.mubr.bf16.mxu0 0
  %305 = vmatmul.mubr.bf16.gmra.mrb[0].mxu0 %v267
  %v306 = vpop.f32.mrb[0].mxu0
  %v307 = vadd.f32 0.0, %v306
  %v308 = vpop.f32.mrb[0].mxu0
  %v309 = vpop.f32.mrb[0].mxu0
  %v310 = vadd.f32 0.0, %v309
  %v311 = vpop.f32.mrb[0].mxu0
  %312 = vmatprep.mubr.bf16.mxu0 0
  %313 = vmatmul.mubr.bf16.gmra.mrb[0].mxu0 %v270
  %v314 = vpop.f32.mrb[0].mxu0
  %v315 = vadd.f32 0.0, %v314
  %v316 = vpop.f32.mrb[0].mxu0
  %v317 = vpop.f32.mrb[0].mxu0
  %v318 = vadd.f32 0.0, %v317
  %v319 = vpop.f32.mrb[0].mxu0
  %320 = vdwg.mxu0
  %v321 = vadd.f32 %v187, %v307
  %v322 = vadd.f32 %v190, %v310
  %v323 = vadd.f32 %v195, %v315
  %v324 = vadd.f32 %v198, %v318
  %v325 = vtanh.pop %v321
  %v326 = vtanh.pop %v322
  %v327 = vtanh.pop %v323
  %v328 = vtanh.pop %v324
  %v329 = vsub.f32 %v325, %v25
  %v330 = vsub.f32 %v326, %v26
  %v331 = vsub.f32 %v327, %v27
  %v332 = vsub.f32 %v328, %v28
  %v333 = vmul.f32 %v218, %v329
  %v334 = vmul.f32 %v220, %v330
  %v335 = vmul.f32 %v222, %v331
  %v336 = vmul.f32 %v224, %v332
  %v337 = vadd.f32 %v25, %v333
  %v338 = vadd.f32 %v26, %v334
  %v339 = vadd.f32 %v27, %v335
  %v340 = vadd.f32 %v28, %v336
  %vm341 = vcmask 130048
  %342 = vst.msk [vmem:[%s5] sm:$0xff] %vm341, %v337
  %343 = vst.msk [vmem:[%s5 + $0x8] sm:$0xff] %vm341, %v338
  %344 = vst.msk [vmem:[%s5 + $0x10] sm:$0xff] %vm341, %v339
  %345 = vst.msk [vmem:[%s5 + $0x18] sm:$0xff] %vm341, %v340
  // Predicated region
  $region22: #{tpu_custom_call.1} parent=0 // pred_check
    _
  $region23: #{tpu_custom_call.1} parent=0 // pred_check_branch
    %347 = sbr.rel (0) target = $region25
  $region24: #{tpu_custom_call.1} parent=0 // pred_region
    _
  $region25: #{tpu_custom_call.1} parent=0 // pred_fallthru
    _
  // Predicated region
  $region26: #{tpu_custom_call.1} parent=0 // pred_check
    _
  $region27: #{tpu_custom_call.1} parent=0 // pred_check_branch
    %349 = sbr.rel (0) target = $region29
  $region28: #{tpu_custom_call.1} parent=0 // pred_region
    _
  $region29: #{tpu_custom_call.1} parent=0 // pred_fallthru
    _

</llo_original>
